<compile_context>
chip_gen: v5e
topology: v5e:2x2
jax: 0.10.0
libtpu: 0.0.40
codegen_flags: <defaults>
</compile_context>

<pallas_src>
import numpy as np
import jax
import jax.numpy as jnp
from jax.experimental import pallas as pl
from jax.experimental.pallas import tpu as pltpu

# ----- synthetic "config" (deterministic, in-script) --------------------------
MEANS = (103.94, 116.78, 123.68)   # BGR means (yolact config.MEANS)
STD = (57.38, 57.12, 58.40)        # BGR stds  (yolact config.STD)
MAX_SIZE = 32                      # small stand-in for config.cfg.max_size
# transform.normalize = True, channel_order = 'RGB', preserve_aspect_ratio = False


def _bilinear_matrix(in_size: int, out_size: int) -> np.ndarray:
    """Row-stochastic (out_size, in_size) matrix matching
    F.interpolate(mode='bilinear', align_corners=False) along one axis."""
    scale = in_size / out_size
    dst = np.arange(out_size, dtype=np.float64)
    src = (dst + 0.5) * scale - 0.5
    src = np.clip(src, 0.0, in_size - 1)
    i0 = np.floor(src).astype(np.int64)
    i1 = np.minimum(i0 + 1, in_size - 1)
    frac = src - i0
    w = np.zeros((out_size, in_size), dtype=np.float64)
    w[np.arange(out_size), i0] += 1.0 - frac
    w[np.arange(out_size), i1] += frac
    return w.astype(np.float32)


# ----- Pallas kernel ----------------------------------------------------------
def _make_fbt_kernel(width_first: bool):
    """Kernel processing one full batch element per grid step.

    bias_ref : VMEM (1, 3*OW) f32   per-output-channel bias, lane-replicated
    wh_ref   : VMEM (OH, H)   bf16  height interpolation matrix
    mw_ref   : VMEM (3W, 3OW) bf16  fused de-interleave + width interp
                                    + BGR->RGB swap + 1/STD scale
    x_ref    : VMEM (H, 3W)   f32   one batch of the NHWC image, lanes = (w, c)
    out_ref  : VMEM (OH, 3OW) f32   lane-dense RGB slab [R | G | B]
    """
    def kernel(bias_ref, wh_ref, mw_ref, x_ref, out_ref):
        x = x_ref[...].astype(jnp.bfloat16)          # bf16 MXU operands
        wh = wh_ref[...]
        mw = mw_ref[...]
        if width_first:
            # (H,3W)@(3W,3OW) -> (H,3OW);  (OH,H)@(H,3OW) -> (OH,3OW)
            t = jnp.dot(x, mw, preferred_element_type=jnp.float32)
            y = jnp.dot(wh, t.astype(jnp.bfloat16),
                        preferred_element_type=jnp.float32)
        else:
            # (OH,H)@(H,3W) -> (OH,3W);  (OH,3W)@(3W,3OW) -> (OH,3OW)
            t = jnp.dot(wh, x, preferred_element_type=jnp.float32)
            y = jnp.dot(t.astype(jnp.bfloat16), mw,
                        preferred_element_type=jnp.float32)
        # 1/STD is already folded into mw; only the bias add remains (f32 VPU,
        # hidden under the MXU slot).
        out_ref[...] = y + bias_ref[...]
    return kernel


def _vmem_budget_bytes(H: int, W: int, OH: int, OW: int) -> int:
    """Derive a scoped-VMEM budget from the actual buffer footprint."""
    const_b = (3 * OW) * 4 + OH * H * 2 + (3 * W) * (3 * OW) * 2
    x_b = H * (3 * W) * 4 * 2                      # double-buffered input slab
    out_b = OH * (3 * OW) * 4 * 2                  # double-buffered output slab
    tmp_b = (max(H * (3 * OW), OH * (3 * W)) + OH * (3 * OW)) * 4  # matmul temps
    est = const_b + x_b + out_b + tmp_b
    # generous headroom; never ask for more than ~3/4 of v7x's 64 MiB VMEM
    return int(min(max(2 * est, 8 << 20), 48 << 20))


def fast_base_transform(img_nhwc: jax.Array, max_size: int = MAX_SIZE) -> jax.Array:
    """img_nhwc: (B, H, W, 3) float32 (BGR pixel values in [0, 255]).
    Returns (B, 3, max_size, max_size) float32, RGB, normalized."""
    B, H, W, C = img_nhwc.shape
    assert C == 3, "FastBaseTransform expects 3 channels"
    OH = OW = max_size

    # Free layout collapse (contiguous trailing dims): (B,H,W,3) -> (B,H,3W)
    x_slab = img_nhwc.reshape(B, H, 3 * W).astype(jnp.float32)

    # Interpolation matrices.
    wh_np = _bilinear_matrix(H, OH)                         # (OH, H)
    ww_np = _bilinear_matrix(W, OW)                         # (OW, W)

    means = np.asarray(MEANS, np.float32)                   # BGR order
    std = np.asarray(STD, np.float32)

    # Fused width matrix: de-interleave NHWC lanes + width interp
    # + BGR->RGB channel swap + 1/STD scale.
    #   Mw[w*3 + cin, cout*OW + ow] = Ww[ow, w] * [cin == 2-cout] / STD[cin]
    mw_np = np.zeros((3 * W, 3 * OW), np.float32)
    for cout in range(3):
        cin = 2 - cout
        mw_np[cin::3, cout * OW:(cout + 1) * OW] = (ww_np / std[cin]).T
    # Per-output-channel bias, replicated along lanes: (1, 3*OW)
    bias_np = np.repeat(-means[::-1] / std[::-1], OW)[None, :].astype(np.float32)

    wh = jnp.asarray(wh_np, dtype=jnp.bfloat16)
    mw = jnp.asarray(mw_np, dtype=jnp.bfloat16)
    bias = jnp.asarray(bias_np, dtype=jnp.float32)

    # Pick the min-MAC association order at trace time.
    macs_h_first = OH * H * (3 * W) + OH * (3 * W) * (3 * OW)
    macs_w_first = H * (3 * W) * (3 * OW) + OH * H * (3 * OW)
    width_first = macs_w_first < macs_h_first
    macs = min(macs_h_first, macs_w_first)

    cost = pl.CostEstimate(
        flops=2 * macs * B,
        transcendentals=0,
        bytes_accessed=(x_slab.size * 4 + B * OH * 3 * OW * 4
                        + wh.size * 2 + mw.size * 2 + bias.size * 4),
    )

    out_slab = pl.pallas_call(
        _make_fbt_kernel(width_first),
        grid=(B,),
        in_specs=[
            pl.BlockSpec((1, 3 * OW), lambda b: (0, 0)),          # bias (constant)
            pl.BlockSpec((OH, H), lambda b: (0, 0)),              # Wh   (constant)
            pl.BlockSpec((3 * W, 3 * OW), lambda b: (0, 0)),      # Mw   (constant)
            pl.BlockSpec((None, H, 3 * W), lambda b: (b, 0, 0)),  # NHWC slab
        ],
        out_specs=pl.BlockSpec((None, OH, 3 * OW), lambda b: (b, 0, 0)),
        out_shape=jax.ShapeDtypeStruct((B, OH, 3 * OW), jnp.float32),
        compiler_params=pltpu.CompilerParams(
            dimension_semantics=("parallel",),   # batch axis feeds both TCs on v7x
            vmem_limit_bytes=_vmem_budget_bytes(H, W, OH, OW),
        ),
        cost_estimate=cost,
    )(bias, wh, mw, x_slab)

    # Layout plumbing only: lane-dense (OH, [R|G|B]*OW) slab -> NCHW RGB.
    return jnp.transpose(out_slab.reshape(B, OH, 3, OW), (0, 2, 1, 3))


# ----- pure-JAX reference for sanity check ------------------------------------
def _reference(img_nhwc, max_size=MAX_SIZE):
    B, H, W, C = img_nhwc.shape
    x = jnp.transpose(img_nhwc, (0, 3, 1, 2)).astype(jnp.float32)      # NCHW
    wh = jnp.asarray(_bilinear_matrix(H, max_size))
    ww = jnp.asarray(_bilinear_matrix(W, max_size))
    y = jnp.einsum("oh,bchw,pw->bcop", wh, x, ww)                       # bilinear resize
    means = jnp.asarray(MEANS, jnp.float32)[None, :, None, None]
    std = jnp.asarray(STD, jnp.float32)[None, :, None, None]
    y = (y - means) / std
    return y[:, ::-1, :, :]                                             # BGR -> RGB


if __name__ == "__main__":
    key = jax.random.PRNGKey(0)
    img = jax.random.uniform(key, (2, 16, 16, 3), jnp.float32, 0.0, 255.0)

    out = fast_base_transform(img)
    out = jax.block_until_ready(out)

    ref = _reference(img)
    assert out.shape == (2, 3, MAX_SIZE, MAX_SIZE)
    # Tolerance relaxed for the bf16-MXU path (f32 accumulation; worst-case
    # post-normalize error ~0.03-0.04, i.e. well under one gray level).
    np.testing.assert_allclose(np.asarray(out), np.asarray(ref), rtol=2e-2, atol=8e-2)

    print("KERNEL_OK")
</pallas_src>

<mosaic_0001>
module attributes {stable_mosaic.version = 11 : i64} {
  func.func @kernel(%arg0: i32, %arg1: memref<1x96xf32, #tpu.memory_space<vmem>>, %arg2: memref<32x16xbf16, #tpu.memory_space<vmem>>, %arg3: memref<48x96xbf16, #tpu.memory_space<vmem>>, %arg4: memref<1x16x48xf32, #tpu.memory_space<vmem>>, %arg5: memref<1x32x96xf32, #tpu.memory_space<vmem>>) attributes {dimension_semantics = [#tpu.dimension_semantics<parallel>], iteration_bounds = array<i64: 2>, scalar_prefetch = 0 : i64, scratch_operands = 0 : i64, tpu.core_type = #tpu.core_type<tc>, window_params = [{pipeline_mode = #tpu.pipeline_mode<synchronous>, transform_indices = @transform_0, window_bounds = array<i64: 1, 96>}, {pipeline_mode = #tpu.pipeline_mode<synchronous>, transform_indices = @transform_1, window_bounds = array<i64: 32, 16>}, {pipeline_mode = #tpu.pipeline_mode<synchronous>, transform_indices = @transform_2, window_bounds = array<i64: 48, 96>}, {transform_indices = @transform_3, window_bounds = array<i64: 1, 16, 48>}, {transform_indices = @transform_4, window_bounds = array<i64: 1, 32, 96>}]} {
    %c0 = arith.constant 0 : index
    %c0_0 = arith.constant 0 : index
    %c0_1 = arith.constant 0 : index
    %0 = vector.load %arg4[%c0, %c0_0, %c0_1] : memref<1x16x48xf32, #tpu.memory_space<vmem>>, vector<1x16x48xf32>
    %1 = vector.shape_cast %0 : vector<1x16x48xf32> to vector<16x48xf32>
    %2 = arith.truncf %1 : vector<16x48xf32> to vector<16x48xbf16>
    %c0_2 = arith.constant 0 : index
    %c0_3 = arith.constant 0 : index
    %3 = vector.load %arg2[%c0_2, %c0_3] : memref<32x16xbf16, #tpu.memory_space<vmem>>, vector<32x16xbf16>
    %c0_4 = arith.constant 0 : index
    %c0_5 = arith.constant 0 : index
    %4 = vector.load %arg3[%c0_4, %c0_5] : memref<48x96xbf16, #tpu.memory_space<vmem>>, vector<48x96xbf16>
    %cst = arith.constant dense<0.000000e+00> : vector<16x96xf32>
    %5 = tpu.matmul %2, %4, %cst {dimension_numbers = #tpu.dot_dimension_numbers<[1], [0], [0], [1], [0, 0, 1, 1], [], []>} : vector<16x48xbf16>, vector<48x96xbf16>, vector<16x96xf32> -> vector<16x96xf32>
    %6 = arith.truncf %5 : vector<16x96xf32> to vector<16x96xbf16>
    %cst_6 = arith.constant dense<0.000000e+00> : vector<32x96xf32>
    %7 = tpu.matmul %3, %6, %cst_6 {dimension_numbers = #tpu.dot_dimension_numbers<[1], [0], [0], [1], [0, 0, 1, 1], [], []>} : vector<32x16xbf16>, vector<16x96xbf16>, vector<32x96xf32> -> vector<32x96xf32>
    %c0_7 = arith.constant 0 : index
    %c0_8 = arith.constant 0 : index
    %8 = vector.load %arg1[%c0_7, %c0_8] : memref<1x96xf32, #tpu.memory_space<vmem>>, vector<1x96xf32>
    %9 = vector.broadcast %8 : vector<1x96xf32> to vector<32x96xf32>
    %10 = arith.addf %7, %9 : vector<32x96xf32>
    %c0_9 = arith.constant 0 : index
    %c0_10 = arith.constant 0 : index
    %c0_11 = arith.constant 0 : index
    %11 = vector.load %arg5[%c0_9, %c0_10, %c0_11] : memref<1x32x96xf32, #tpu.memory_space<vmem>>, vector<1x32x96xf32>
    %12 = vector.shape_cast %11 : vector<1x32x96xf32> to vector<32x96xf32>
    %13 = vector.shape_cast %10 : vector<32x96xf32> to vector<1x32x96xf32>
    tpu.vector_store %arg5[%c0_9, %c0_10, %c0_11], %13 {strides = array<i32>} : memref<1x32x96xf32, #tpu.memory_space<vmem>>, vector<1x32x96xf32>,
    return
  }
  func.func @transform_0(%arg0: i32) -> (i32, i32) {
    %c0_i32 = arith.constant 0 : i32
    %c0_i32_0 = arith.constant 0 : i32
    %c0_i32_1 = arith.constant 0 : i32
    return %c0_i32, %c0_i32_0 : i32, i32
  }
  func.func @transform_1(%arg0: i32) -> (i32, i32) {
    %c0_i32 = arith.constant 0 : i32
    %c0_i32_0 = arith.constant 0 : i32
    %c0_i32_1 = arith.constant 0 : i32
    return %c0_i32, %c0_i32_0 : i32, i32
  }
  func.func @transform_2(%arg0: i32) -> (i32, i32) {
    %c0_i32 = arith.constant 0 : i32
    %c0_i32_0 = arith.constant 0 : i32
    %c0_i32_1 = arith.constant 0 : i32
    return %c0_i32, %c0_i32_0 : i32, i32
  }
  func.func @transform_3(%arg0: i32) -> (i32, i32, i32) {
    %c0_i32 = arith.constant 0 : i32
    %c0_i32_0 = arith.constant 0 : i32
    %c0_i32_1 = arith.constant 0 : i32
    return %arg0, %c0_i32, %c0_i32_0 : i32, i32, i32
  }
  func.func @transform_4(%arg0: i32) -> (i32, i32, i32) {
    %c0_i32 = arith.constant 0 : i32
    %c0_i32_0 = arith.constant 0 : i32
    %c0_i32_1 = arith.constant 0 : i32
    return %arg0, %c0_i32, %c0_i32_0 : i32, i32, i32
  }
}

</mosaic_0001>

<llo_original>
// kernel: tpu_custom_call.1
$region0: #{tpu_custom_call.1}
  #allocation0 [shape = 'u32[]', space=smem, size = 0x4, offset = 0x4, fixed_abs, tag = 'smem constant byte address 0x4 - core index']
  #allocation1 [shape = 'u32[72,128]{1,0:T(1,128)}', space=vmem, size = 0x9000, scoped, tag = 'internal scratch']
  %s0 = inlined_call_operand.vmem [shape: f32[1,96], index: 0, kind: input, shape index: {}]
  %s1 = inlined_call_operand.vmem [shape: bf16[32,16], index: 1, kind: input, shape index: {}]
  %s2 = inlined_call_operand.vmem [shape: bf16[48,96], index: 2, kind: input, shape index: {}]
  %s3 = inlined_call_operand.hbm [shape: f32[2,16,48], index: 3, kind: input, shape index: {}]
  %s4 = inlined_call_operand.hbm [shape: f32[2,32,96], index: 4, kind: output, shape index: {}]
  %s5 = sld [smem:[#allocation0]]
  $region53: #{tpu_custom_call.1} parent=0
    _
  %s7 = ssub.s32 1, %s5
  %s8 = scalar_select 0, %s7, %s5
  $region1: #{tpu_custom_call.1} parent=0
    #allocation2 [shape = 'u8[16384]{0}', space=vmem, size = 0x4000, scoped, tag = 'input window, operand 3']
    #allocation3 [shape = 's32[2]{0}', space=sflag, size = 0x8, scoped, tag = 'scoped memory for tpu_custom_call.1']
    #allocation4 [shape = 's32[2]{0}', space=sflag, size = 0x8, scoped, tag = 'scoped memory for tpu_custom_call.1']
    #allocation5 [shape = 'u8[32768]{0}', space=vmem, size = 0x8000, scoped, tag = 'output window, operand 0']
    %9 = vsyncpa [#allocation3], 0
    %s10 = scalar_lea.sflag [#allocation3], 1
    %11 = vsyncpa %s10, 0
    %12 = vsyncpa [#allocation4], 0
    %s13 = scalar_lea.sflag [#allocation4], 1
    %14 = vsyncpa %s13, 0
    loop: start=0, step=1, limit=4
    $region2: #{tpu_custom_call.1} parent=1 // loop_pre_header
      _
    $region3: #{tpu_custom_call.1} parent=1 // loop_header
      %s16 = sphi 0, %s20
      %p17 = scmp.ge.s32.totalorder %s16, 4
      %s24 = sphi 0, %s24
      %s26 = sphi 0, %s24
      %s27 = sphi 0, %s26
      %s41 = sphi 0, %s27
      %s45 = sphi 0, %s45
      %s47 = sphi 0, %s45
      %s48 = sphi 0, %s47
      %s62 = sphi 0, %s48
      %s66 = sphi 0, %s66
      %s68 = sphi 0, %s66
      %s69 = sphi 0, %s68
      %s83 = sphi 0, %s69
      %s89 = sphi 0, %s91
      %s92 = sphi 0, %s89
      %s93 = sphi 0, %s92
      %s109 = sphi 0, %s93
      %s115 = sphi 0, %s117
      %s118 = sphi 0, %s115
      %s119 = sphi 0, %s118
      %s135 = sphi 0, %s119
    $region4: #{tpu_custom_call.1} parent=1 // loop_header_branch
      %19 = sbr.rel (%p17) target = $region8
    $region5: #{tpu_custom_call.1} parent=1 // loop_body
      %s21 = ssub.s32 %s16, 1
      %s22 = ssub.s32 %s16, 2
      %s23 = sadd.s32 %s16, 1
      %s25 = sadd.s32 %s24, 1
      %p28 = scmp.eq.s32.totalorder %s16, 1
      %p29 = scmp.ne.s32.totalorder %s24, %s26
      %p30 = scmp.eq.s32.totalorder %s16, 0
      %p31 = por %p29, %p30
      %p32 = scmp.ne.s32.totalorder %s24, %s26
      %p33 = scmp.eq.s32.totalorder %s21, 1
      %p34 = por %p32, %p33
      %p35 = scmp.ne.s32.totalorder %s26, %s27
      %p36 = scmp.eq.s32.totalorder %s21, 0
      %p37 = por %p35, %p36
      %p38 = scmp.ne.s32.totalorder %s26, %s27
      %p39 = scmp.eq.s32.totalorder %s22, 1
      %p40 = por %p38, %p39
      %p42 = scmp.ne.s32.totalorder %s27, %s41
      %p43 = scmp.eq.s32.totalorder %s22, 0
      %p44 = por %p42, %p43
      %s46 = sadd.s32 %s45, 1
      %p49 = scmp.eq.s32.totalorder %s16, 1
      %p50 = scmp.ne.s32.totalorder %s45, %s47
      %p51 = scmp.eq.s32.totalorder %s16, 0
      %p52 = por %p50, %p51
      %p53 = scmp.ne.s32.totalorder %s45, %s47
      %p54 = scmp.eq.s32.totalorder %s21, 1
      %p55 = por %p53, %p54
      %p56 = scmp.ne.s32.totalorder %s47, %s48
      %p57 = scmp.eq.s32.totalorder %s21, 0
      %p58 = por %p56, %p57
      %p59 = scmp.ne.s32.totalorder %s47, %s48
      %p60 = scmp.eq.s32.totalorder %s22, 1
      %p61 = por %p59, %p60
      %p63 = scmp.ne.s32.totalorder %s48, %s62
      %p64 = scmp.eq.s32.totalorder %s22, 0
      %p65 = por %p63, %p64
      %s67 = sadd.s32 %s66, 1
      %p70 = scmp.eq.s32.totalorder %s16, 1
      %p71 = scmp.ne.s32.totalorder %s66, %s68
      %p72 = scmp.eq.s32.totalorder %s16, 0
      %p73 = por %p71, %p72
      %p74 = scmp.ne.s32.totalorder %s66, %s68
      %p75 = scmp.eq.s32.totalorder %s21, 1
      %p76 = por %p74, %p75
      %p77 = scmp.ne.s32.totalorder %s68, %s69
      %p78 = scmp.eq.s32.totalorder %s21, 0
      %p79 = por %p77, %p78
      %p80 = scmp.ne.s32.totalorder %s68, %s69
      %p81 = scmp.eq.s32.totalorder %s22, 1
      %p82 = por %p80, %p81
      %p84 = scmp.ne.s32.totalorder %s69, %s83
      %p85 = scmp.eq.s32.totalorder %s22, 0
      %p86 = por %p84, %p85
      %s87 = ssub.s32 %s16, %s23
      %p88 = scmp.eq.s32.totalorder %s87, 0
      %s90 = sadd.s32 %s89, 1
      %s91 = scalar_select %p88, %s89, %s90
      %p94 = pneg %p88
      %p95 = scmp.eq.s32.totalorder %s16, 1
      %p96 = por %p94, %p95
      %p97 = scmp.ne.s32.totalorder %s89, %s92
      %p98 = scmp.eq.s32.totalorder %s16, 0
      %p99 = por %p97, %p98
      %p100 = scmp.ne.s32.totalorder %s89, %s92
      %p101 = scmp.eq.s32.totalorder %s21, 1
      %p102 = por %p100, %p101
      %p103 = scmp.ne.s32.totalorder %s92, %s93
      %p104 = scmp.eq.s32.totalorder %s21, 0
      %p105 = por %p103, %p104
      %p106 = scmp.ne.s32.totalorder %s92, %s93
      %p107 = scmp.eq.s32.totalorder %s22, 1
      %p108 = por %p106, %p107
      %p110 = scmp.ne.s32.totalorder %s93, %s109
      %p111 = scmp.eq.s32.totalorder %s22, 0
      %p112 = por %p110, %p111
      %s113 = ssub.s32 %s16, %s23
      %p114 = scmp.eq.s32.totalorder %s113, 0
      %s116 = sadd.s32 %s115, 1
      %s117 = scalar_select %p114, %s115, %s116
      %p120 = pneg %p114
      %p121 = scmp.eq.s32.totalorder %s16, 1
      %p122 = por %p120, %p121
      %p123 = scmp.ne.s32.totalorder %s115, %s118
      %p124 = scmp.eq.s32.totalorder %s16, 0
      %p125 = por %p123, %p124
      %p126 = scmp.ne.s32.totalorder %s115, %s118
      %p127 = scmp.eq.s32.totalorder %s21, 1
      %p128 = por %p126, %p127
      %p129 = scmp.ne.s32.totalorder %s118, %s119
      %p130 = scmp.eq.s32.totalorder %s21, 0
      %p131 = por %p129, %p130
      %p132 = scmp.ne.s32.totalorder %s118, %s119
      %p133 = scmp.eq.s32.totalorder %s22, 1
      %p134 = por %p132, %p133
      %p136 = scmp.ne.s32.totalorder %s119, %s135
      %p137 = scmp.eq.s32.totalorder %s22, 0
      %p138 = por %p136, %p137
      %p139 = scmp.le.s32.totalorder 1, %s16
      %p140 = scmp.lt.s32.totalorder %s16, 3
      %p141 = pnand %p139, %p140
      %p142 = pneg %p141
      // Predicated region
      $region9: #{tpu_custom_call.1} parent=5 // pred_check
        _
      $region10: #{tpu_custom_call.1} parent=5 // pred_check_branch
        %144 = sbr.rel (%p141) target = $region12
      $region11: #{tpu_custom_call.1} parent=5 // pred_region
        %s145 = ssub.s32 %s16, 1
        // Predicated region
        $region13: #{tpu_custom_call.1} parent=11 // pred_check
          %p146 = pneg %p37
        $region14: #{tpu_custom_call.1} parent=11 // pred_check_branch
          %148 = sbr.rel (%p146) target = $region16
        $region15: #{tpu_custom_call.1} parent=11 // pred_region
          _
        $region16: #{tpu_custom_call.1} parent=11 // pred_fallthru
          _
        // Predicated region
        $region17: #{tpu_custom_call.1} parent=11 // pred_check
          %p149 = pneg %p58
        $region18: #{tpu_custom_call.1} parent=11 // pred_check_branch
          %151 = sbr.rel (%p149) target = $region20
        $region19: #{tpu_custom_call.1} parent=11 // pred_region
          _
        $region20: #{tpu_custom_call.1} parent=11 // pred_fallthru
          _
        // Predicated region
        $region21: #{tpu_custom_call.1} parent=11 // pred_check
          %p152 = pneg %p79
        $region22: #{tpu_custom_call.1} parent=11 // pred_check_branch
          %154 = sbr.rel (%p152) target = $region24
        $region23: #{tpu_custom_call.1} parent=11 // pred_region
          _
        $region24: #{tpu_custom_call.1} parent=11 // pred_fallthru
          _
      $region12: #{tpu_custom_call.1} parent=5 // pred_fallthru
        _
      %p155 = scmp.lt.s32.totalorder %s16, 2
      // Predicated region
      $region25: #{tpu_custom_call.1} parent=5 // pred_check
        %p156 = pneg %p155
      $region26: #{tpu_custom_call.1} parent=5 // pred_check_branch
        %158 = sbr.rel (%p156) target = $region28
      $region27: #{tpu_custom_call.1} parent=5 // pred_region
        // Predicated region
        $region29: #{tpu_custom_call.1} parent=27 // pred_check
          %p159 = pneg %p99
        $region30: #{tpu_custom_call.1} parent=27 // pred_check_branch
          %161 = sbr.rel (%p159) target = $region32
        $region31: #{tpu_custom_call.1} parent=27 // pred_region
          %s162 = sand.u32 %s89, 1
          %s163 = scalar_lea.sflag [#allocation3], %s162
          %s164 = sand.u32 %s89, 1
          %s165 = smul.addr %s164, 16
          %s166 = scalar_lea.vmem [#allocation2], %s165
          %168 = vsyncadd %s163, 0
          %s169 = smul.addr %s16, 2
          %s170 = smul.addr %s169, 8
          %s171 = scalar_lea.hbm %s3, %s170
          %s172 = sshll.u32 %s171, 4
          %s173 = int_to_ptr.hbm [resolvable:$true] %s172
          %s174 = sshll.u32 %s166, 4
          %s175 = int_to_ptr.vmem [resolvable:$true] %s174
          %180 = dma.hbm_to_vmem [thread:$0]  %s173, 256, %s175, %s163, 128, 128, 8
        $region32: #{tpu_custom_call.1} parent=27 // pred_fallthru
          _
      $region28: #{tpu_custom_call.1} parent=5 // pred_fallthru
        _
      %p181 = scmp.le.s32.totalorder 1, %s16
      %p182 = scmp.lt.s32.totalorder %s16, 3
      %p183 = pnand %p181, %p182
      %p184 = pneg %p183
      // Predicated region
      $region33: #{tpu_custom_call.1} parent=5 // pred_check
        _
      $region34: #{tpu_custom_call.1} parent=5 // pred_check_branch
        %186 = sbr.rel (%p183) target = $region36
      $region35: #{tpu_custom_call.1} parent=5 // pred_region
        %s187 = ssub.s32 %s16, 1
        %s188 = sand.u32 %s92, 1
        %s189 = scalar_lea.sflag [#allocation3], %s188
        %s190 = sand.u32 %s92, 1
        %s191 = smul.addr %s190, 16
        %s192 = scalar_lea.vmem [#allocation2], %s191
        // Predicated region
        $region37: #{tpu_custom_call.1} parent=35 // pred_check
          %p193 = pneg %p105
        $region38: #{tpu_custom_call.1} parent=35 // pred_check_branch
          %195 = sbr.rel (%p193) target = $region40
        $region39: #{tpu_custom_call.1} parent=35 // pred_region
          %197 = dma.done %s189, 256
        $region40: #{tpu_custom_call.1} parent=35 // pred_fallthru
          _
        %p198 = pneg %p37
        %p199 = pneg %p34
        %p200 = pneg %p58
        %p201 = pneg %p55
        %p202 = pneg %p79
        %p203 = pneg %p76
        %s204 = sand.u32 %s92, 1
        %s205 = scalar_lea.sflag [#allocation3], %s204
        %s206 = sand.u32 %s92, 1
        %s207 = smul.addr %s206, 16
        %s208 = scalar_lea.vmem [#allocation2], %s207
        %p209 = pneg %p105
        %p210 = pneg %p102
        %p211 = pneg %p131
        %p212 = pneg %p128
        %s213 = sand.u32 %s118, 1
        %s214 = scalar_lea.sflag [#allocation4], %s213
        %s215 = sand.u32 %s118, 1
        %s216 = smul.addr %s215, 32
        %s217 = scalar_lea.vmem [#allocation5], %s216
        %v219 = vld [vmem:[%s192] sm:$0xff]
        %v220 = vld [vmem:[%s192 + $0x8] sm:$0xff]
        %v221 = vpack.c.bf16 %v220, %v219
        %v222 = vld [vmem:[%s1] sm:$0xf]
        %v223 = vld [vmem:[%s1 + $0x4] sm:$0xf]
        %v224 = vld [vmem:[%s1 + $0x8] sm:$0xf]
        %v225 = vld [vmem:[%s1 + $0xc] sm:$0xf]
        %v226 = vld [vmem:[%s2] sm:$0xf]
        %v227 = vld [vmem:[%s2 + $0x4] sm:$0xf]
        %v228 = vld [vmem:[%s2 + $0x8] sm:$0xf]
        %v229 = vld [vmem:[%s2 + $0xc] sm:$0xf]
        %v230 = vld [vmem:[%s2 + $0x10] sm:$0xf]
        %v231 = vld [vmem:[%s2 + $0x14] sm:$0xf]
        %v238 = vunpack.c.l.b16 %v226
        %v239 = vunpack.c.l.b16 %v227
        %v240 = vunpack.c.l.b16 %v228
        %v241 = vunpack.c.l.b16 %v229
        %v242 = vunpack.c.l.b16 %v230
        %v243 = vunpack.c.l.b16 %v231
        %v244 = vpack.c.b16 %v239, %v238
        %v245 = vpack.c.b16 %v241, %v240
        %v246 = vpack.c.b16 %v243, %v242
        %vm250 = vcmask 392192
        %v252 = vsel %vm250, %v221, 0
        %254 = vmatpush.bf16.msra.mxu0 0
        %255 = vmatpush.bf16.msra.mxu0 0
        %256 = vmatpush.bf16.msra.mxu0 0
        %257 = vmatpush.bf16.msra.mxu0 0
        %258 = vmatpush.bf16.msra.mxu0 0
        %259 = vmatpush.bf16.msra.mxu0 %v246
        %260 = vmatpush.bf16.msra.mxu0 %v245
        %261 = vmatpush.bf16.msra.mxu0 %v244
        %262 = vmatmul.bf16.gmra.mxu0 %v252
        %v263 = vpop.f32.mrf.mxu0
        %v264 = vadd.f32 0.0, %v263
        %v265 = vpop.f32.mrf.mxu0
        %v266 = vadd.f32 0.0, %v265
        %267 = vdwg.mxu0
        %v268 = vpack.c.bf16 %v266, %v264
        %v269 = vld [vmem:[%s0] sm:$0x1]
        %v271 = vperm.slane %v269, 0
        %v277 = vunpack.c.l.b16 %v222
        %v278 = vunpack.c.l.b16 %v223
        %v279 = vunpack.c.l.b16 %v224
        %v280 = vunpack.c.l.b16 %v225
        %v281 = vpack.c.b16 %v278, %v277
        %v282 = vpack.c.b16 %v280, %v279
        %vm283 = vcmask 130048
        %v285 = vsel %vm283, %v281, 0
        %v288 = vsel %vm283, %v282, 0
        %290 = vmatpush.bf16.msra.mxu0 0
        %291 = vmatpush.bf16.msra.mxu0 0
        %292 = vmatpush.bf16.msra.mxu0 0
        %293 = vmatpush.bf16.msra.mxu0 0
        %294 = vmatpush.bf16.msra.mxu0 0
        %295 = vmatpush.bf16.msra.mxu0 0
        %296 = vmatpush.bf16.msra.mxu0 0
        %297 = vmatpush.bf16.msra.mxu0 %v268
        %298 = vmatmul.bf16.gmra.mxu0 %v285
        %v299 = vpop.f32.mrf.mxu0
        %v300 = vadd.f32 %v271, %v299
        %v301 = vpop.f32.mrf.mxu0
        %v302 = vadd.f32 %v271, %v301
        %303 = vmatmul.bf16.gmra.mxu0 %v288
        %v304 = vpop.f32.mrf.mxu0
        %v305 = vadd.f32 %v271, %v304
        %v306 = vpop.f32.mrf.mxu0
        %v307 = vadd.f32 %v271, %v306
        %308 = vdwg.mxu0
        %vm309 = vcmask 785408
        %310 = vst.msk [vmem:[%s217] sm:$0xff] %vm309, %v300
        %311 = vst.msk [vmem:[%s217 + $0x8] sm:$0xff] %vm309, %v302
        %312 = vst.msk [vmem:[%s217 + $0x10] sm:$0xff] %vm309, %v305
        %313 = vst.msk [vmem:[%s217 + $0x18] sm:$0xff] %vm309, %v307
        %s314 = sand.u32 %s118, 1
        %s315 = scalar_lea.sflag [#allocation4], %s314
        %s316 = sand.u32 %s118, 1
        %s317 = smul.addr %s316, 32
        %s318 = scalar_lea.vmem [#allocation5], %s317
        // Predicated region
        $region41: #{tpu_custom_call.1} parent=35 // pred_check
          %p319 = pneg %p128
        $region42: #{tpu_custom_call.1} parent=35 // pred_check_branch
          %321 = sbr.rel (%p319) target = $region44
        $region43: #{tpu_custom_call.1} parent=35 // pred_region
          %323 = vsyncadd %s315, 0
          %s324 = smul.addr %s21, 4
          %s325 = smul.addr %s324, 8
          %s326 = scalar_lea.hbm %s4, %s325
          %s327 = sshll.u32 %s318, 4
          %s328 = int_to_ptr.vmem [resolvable:$true] %s327
          %s329 = sshll.u32 %s326, 4
          %s330 = int_to_ptr.hbm [resolvable:$true] %s329
          %335 = dma.vmem_to_hbm [thread:$0]  %s328, 512, %s330, %s315, 128, 128, 8
        $region44: #{tpu_custom_call.1} parent=35 // pred_fallthru
          _
      $region36: #{tpu_custom_call.1} parent=5 // pred_fallthru
        _
      %p336 = scmp.le.s32.totalorder 2, %s16
      // Predicated region
      $region45: #{tpu_custom_call.1} parent=5 // pred_check
        %p337 = pneg %p336
      $region46: #{tpu_custom_call.1} parent=5 // pred_check_branch
        %339 = sbr.rel (%p337) target = $region48
      $region47: #{tpu_custom_call.1} parent=5 // pred_region
        %s340 = ssub.s32 %s16, 2
        // Predicated region
        $region49: #{tpu_custom_call.1} parent=47 // pred_check
          %p341 = pneg %p134
        $region50: #{tpu_custom_call.1} parent=47 // pred_check_branch
          %343 = sbr.rel (%p341) target = $region52
        $region51: #{tpu_custom_call.1} parent=47 // pred_region
          %s344 = sand.u32 %s119, 1
          %s345 = scalar_lea.sflag [#allocation4], %s344
          %s346 = sand.u32 %s119, 1
          %s347 = smul.addr %s346, 32
          %s348 = scalar_lea.vmem [#allocation5], %s347
          %350 = dma.done %s345, 512
        $region52: #{tpu_custom_call.1} parent=47 // pred_fallthru
          _
      $region48: #{tpu_custom_call.1} parent=5 // pred_fallthru
        _
    $region6: #{tpu_custom_call.1} parent=1 // loop_footer
      %s20 = sadd.s32 1, %s16
    $region7: #{tpu_custom_call.1} parent=1 // loop_footer_branch
      %15 = sbr.rel target = $region3
    $region8: #{tpu_custom_call.1} parent=1 // loop_exit
      _
    %351 = vsyncpa [#allocation3], 1
    %s352 = scalar_lea.sflag [#allocation3], 1
    %353 = vsyncpa %s352, 1
    %354 = vsyncpa [#allocation4], 1
    %s355 = scalar_lea.sflag [#allocation4], 1
    %356 = vsyncpa %s355, 1

</llo_original>
